<compile_context>
chip_gen: v6e
topology: v6e:2x2x1
jax: 0.10.0
libtpu: 0.0.40
codegen_flags: <defaults>
</compile_context>

<pallas_src>
import functools

import numpy as np

import jax
import jax.numpy as jnp
from jax.experimental import pallas as pl
from jax.experimental.pallas import tpu as pltpu


def _round_up(x, m):
    return (x + m - 1) // m * m


def _fused_cam_kernel(x_ref, mask_ref, *rest, chans_p, shifts, p_pad):
    """All Conv3x3 + bias + ReLU layers for one batch element, fused in VMEM.

    x_ref:    (1, Cin0p, P)   padded-frame input (channels-first, flat spatial)
    mask_ref: (1, P)          1.0 at valid interior spatial positions, else 0.0
    rest:     w_0, b_0, ..., w_{L-1}, b_{L-1}, o_ref, buf_a, buf_b
       w_l:   (Coutp_l, 9*Cinp_l)  im2col weight matrix (zero-padded channels)
       b_l:   (Coutp_l, 1)
       o_ref: (1, Coutp_last, P)
       buf_*: (Cmax, P) f32 VMEM ping-pong activation slabs
    """
    num_layers = len(chans_p) - 1
    w_refs = rest[0:2 * num_layers:2]
    b_refs = rest[1:2 * num_layers:2]
    o_ref = rest[2 * num_layers]
    bufs = (rest[2 * num_layers + 1], rest[2 * num_layers + 2])

    mask = mask_ref[...]                                    # (1, P)
    x = x_ref[0]                                            # (Cin0p, P)

    for layer in range(num_layers):
        cout_p = chans_p[layer + 1]
        w = w_refs[layer][...]                              # (Coutp, 9*Cinp)
        b = b_refs[layer][...]                              # (Coutp, 1)

        # im2col: 9 lane-rotated copies of the activation stacked along the
        # contraction axis.  Wrapped lanes only ever reach halo positions,
        # which are zeroed by `mask` below, so the rotation is safe.
        taps = []
        for s in shifts:
            amt = (-s) % p_pad
            taps.append(x if amt == 0 else pltpu.roll(x, amt, 1))
        patches = jnp.concatenate(taps, axis=0)             # (9*Cinp, P)

        acc = jnp.dot(w, patches, preferred_element_type=jnp.float32)
        y = jnp.maximum(acc + b, 0.0) * mask                # (Coutp, P)

        if layer == num_layers - 1:
            o_ref[0] = y.astype(o_ref.dtype)                # lane-dense store
        else:
            buf = bufs[layer % 2]
            buf[0:cout_p, :] = y                            # stays in VMEM
            x = buf[0:cout_p, :]


def cam_layers_forward(x_nchw, params, *, d_rate=1):
    """Forward pass matching CAM_layers.forward (NCHW in, NCHW out).

    params: list of (weight (Cout, Cin, 3, 3) [OIHW], bias (Cout,)) per layer.
    """
    n, c_in, height, width = x_nchw.shape
    pad = d_rate
    hp, wp = height + 2 * pad, width + 2 * pad
    p = hp * wp
    p_pad = _round_up(p, 128)

    chans = [c_in] + [w.shape[0] for w, _ in params]
    chans_p = [_round_up(c, 8) for c in chans]
    c_max = max(chans_p)
    c_out = chans[-1]
    c_out_p = chans_p[-1]

    # Pad the input once (fused stack => a single pad, not one per layer),
    # flatten the padded spatial frame, zero-pad channels / lanes to align.
    x_p = jnp.pad(x_nchw, ((0, 0), (0, 0), (pad, pad), (pad, pad)))
    x_flat = x_p.reshape(n, c_in, p)
    x_flat = jnp.pad(x_flat, ((0, 0), (0, chans_p[0] - c_in), (0, p_pad - p)))

    # Valid-position mask in the padded frame: zeroing the halo after every
    # layer provides the next layer's "same" zero padding for free.
    idx = np.arange(p_pad)
    rows, cols = idx // wp, idx % wp
    valid = ((idx < p)
             & (rows >= pad) & (rows < height + pad)
             & (cols >= pad) & (cols < width + pad))
    mask = jnp.asarray(valid.astype(np.float32)).reshape(1, p_pad)

    # Tap shifts in the flat padded frame, ordered (kh, kw) row-major.
    shifts = tuple(d_rate * ((kh - 1) * wp + (kw - 1))
                   for kh in range(3) for kw in range(3))

    # Per-layer im2col weight matrices / bias columns (channel-padded).
    inputs = [x_flat, mask]
    in_specs = [
        pl.BlockSpec((1, chans_p[0], p_pad), lambda i: (i, 0, 0)),
        pl.BlockSpec((1, p_pad), lambda i: (0, 0)),
    ]
    for layer, (w_oihw, bias) in enumerate(params):
        cout, cin = chans[layer + 1], chans[layer]
        cout_p, cin_p = chans_p[layer + 1], chans_p[layer]
        wt = jnp.transpose(w_oihw, (0, 2, 3, 1))            # (Cout, 3, 3, Cin)
        wt = jnp.pad(wt, ((0, cout_p - cout), (0, 0), (0, 0),
                          (0, cin_p - cin)))
        w_mat = wt.reshape(cout_p, 9 * cin_p)
        b_col = jnp.pad(bias, (0, cout_p - cout)).reshape(cout_p, 1)
        inputs += [w_mat, b_col]
        # NOTE: weight/bias blocks are constant across the grid and tiny here;
        # for 512-channel cfgs single-buffer them to halve their VMEM footprint.
        in_specs += [
            pl.BlockSpec((cout_p, 9 * cin_p), lambda i: (0, 0)),
            pl.BlockSpec((cout_p, 1), lambda i: (0, 0)),
        ]

    kernel = functools.partial(
        _fused_cam_kernel,
        chans_p=tuple(chans_p), shifts=shifts, p_pad=p_pad)

    out_flat = pl.pallas_call(
        kernel,
        out_shape=jax.ShapeDtypeStruct((n, c_out_p, p_pad), x_nchw.dtype),
        grid_spec=pltpu.PrefetchScalarGridSpec(
            num_scalar_prefetch=0,
            grid=(n,),
            in_specs=in_specs,
            out_specs=pl.BlockSpec((1, c_out_p, p_pad), lambda i: (i, 0, 0)),
            scratch_shapes=[
                pltpu.VMEM((c_max, p_pad), jnp.float32),
                pltpu.VMEM((c_max, p_pad), jnp.float32),
            ],
        ),
        compiler_params=pltpu.CompilerParams(
            dimension_semantics=("parallel",),
            vmem_limit_bytes=32 * 1024 * 1024,
        ),
    )(*inputs)

    # Drop channel / lane padding and the halo -> NCHW output.
    out = out_flat[:, :c_out, :p].reshape(n, c_out, hp, wp)
    return out[:, :, pad:pad + height, pad:pad + width]


def init_cam_params(cfg, in_channels, key, dtype=jnp.float32):
    """Deterministic Conv2d parameter init (PyTorch OIHW shapes, k=3)."""
    params = []
    c_in = in_channels
    for i, v in enumerate(cfg):
        k_w, k_b = jax.random.split(jax.random.fold_in(key, i))
        bound = 1.0 / float(np.sqrt(c_in * 9))
        w = jax.random.uniform(k_w, (v, c_in, 3, 3), dtype, -bound, bound)
        b = jax.random.uniform(k_b, (v,), dtype, -bound, bound)
        params.append((w, b))
        c_in = v
    return params


def _reference_forward(x_nchw, params, *, d_rate=1):
    """Pure-JAX reference (lax conv) for a correctness sanity check."""
    x = x_nchw
    for w, b in params:
        y = jax.lax.conv_general_dilated(
            x, w, window_strides=(1, 1),
            padding=[(d_rate, d_rate), (d_rate, d_rate)],
            rhs_dilation=(d_rate, d_rate),
            dimension_numbers=("NCHW", "OIHW", "NCHW"))
        x = jnp.maximum(y + b[None, :, None, None], 0.0)
    return x


if __name__ == "__main__":
    key = jax.random.PRNGKey(0)
    cfg = [8, 16]                    # two Conv3x3+ReLU layers
    in_channels = 3
    n, height, width = 2, 16, 16

    k_x, k_p = jax.random.split(key)
    x = jax.random.normal(k_x, (n, in_channels, height, width),
                          dtype=jnp.float32)
    params = init_cam_params(cfg, in_channels, k_p)

    fwd = jax.jit(cam_layers_forward)
    out = jax.block_until_ready(fwd(x, params))

    ref = _reference_forward(x, params)
    assert out.shape == (n, cfg[-1], height, width), out.shape
    assert jnp.allclose(out, ref, atol=1e-3, rtol=1e-3), "mismatch vs reference"

    print("KERNEL_OK")
</pallas_src>

<mosaic_0001>
module attributes {stable_mosaic.version = 11 : i64} {
  func.func @_fused_cam_kernel(%arg0: i32, %arg1: memref<1x8x384xf32, #tpu.memory_space<vmem>>, %arg2: memref<1x384xf32, #tpu.memory_space<vmem>>, %arg3: memref<8x72xf32, #tpu.memory_space<vmem>>, %arg4: memref<8x1xf32, #tpu.memory_space<vmem>>, %arg5: memref<16x72xf32, #tpu.memory_space<vmem>>, %arg6: memref<16x1xf32, #tpu.memory_space<vmem>>, %arg7: memref<1x16x384xf32, #tpu.memory_space<vmem>>, %arg8: memref<16x384xf32, #tpu.memory_space<vmem>>, %arg9: memref<16x384xf32, #tpu.memory_space<vmem>>) attributes {dimension_semantics = [#tpu.dimension_semantics<parallel>], iteration_bounds = array<i64: 2>, scalar_prefetch = 0 : i64, scratch_operands = 2 : i64, tpu.core_type = #tpu.core_type<tc>, window_params = [{transform_indices = @transform_0, window_bounds = array<i64: 1, 8, 384>}, {pipeline_mode = #tpu.pipeline_mode<synchronous>, transform_indices = @transform_1, window_bounds = array<i64: 1, 384>}, {pipeline_mode = #tpu.pipeline_mode<synchronous>, transform_indices = @transform_2, window_bounds = array<i64: 8, 72>}, {pipeline_mode = #tpu.pipeline_mode<synchronous>, transform_indices = @transform_3, window_bounds = array<i64: 8, 1>}, {pipeline_mode = #tpu.pipeline_mode<synchronous>, transform_indices = @transform_4, window_bounds = array<i64: 16, 72>}, {pipeline_mode = #tpu.pipeline_mode<synchronous>, transform_indices = @transform_5, window_bounds = array<i64: 16, 1>}, {transform_indices = @transform_6, window_bounds = array<i64: 1, 16, 384>}]} {
    %c0 = arith.constant 0 : index
    %c0_0 = arith.constant 0 : index
    %0 = vector.load %arg2[%c0, %c0_0] : memref<1x384xf32, #tpu.memory_space<vmem>>, vector<1x384xf32>
    %c0_1 = arith.constant 0 : index
    %c0_2 = arith.constant 0 : index
    %c0_3 = arith.constant 0 : index
    %1 = vector.load %arg1[%c0_1, %c0_2, %c0_3] : memref<1x8x384xf32, #tpu.memory_space<vmem>>, vector<1x8x384xf32>
    %2 = vector.shape_cast %1 : vector<1x8x384xf32> to vector<8x384xf32>
    %c0_4 = arith.constant 0 : index
    %c0_5 = arith.constant 0 : index
    %3 = vector.load %arg3[%c0_4, %c0_5] : memref<8x72xf32, #tpu.memory_space<vmem>>, vector<8x72xf32>
    %c0_6 = arith.constant 0 : index
    %c0_7 = arith.constant 0 : index
    %4 = vector.load %arg4[%c0_6, %c0_7] : memref<8x1xf32, #tpu.memory_space<vmem>>, vector<8x1xf32>
    %c19_i32 = arith.constant 19 : i32
    %5 = tpu.dynamic_rotate %2 by %c19_i32 dim 1 : vector<8x384xf32>, i32 -> vector<8x384xf32>
    %c18_i32 = arith.constant 18 : i32
    %6 = tpu.dynamic_rotate %2 by %c18_i32 dim 1 : vector<8x384xf32>, i32 -> vector<8x384xf32>
    %c17_i32 = arith.constant 17 : i32
    %7 = tpu.dynamic_rotate %2 by %c17_i32 dim 1 : vector<8x384xf32>, i32 -> vector<8x384xf32>
    %c1_i32 = arith.constant 1 : i32
    %8 = tpu.dynamic_rotate %2 by %c1_i32 dim 1 : vector<8x384xf32>, i32 -> vector<8x384xf32>
    %c383_i32 = arith.constant 383 : i32
    %9 = tpu.dynamic_rotate %2 by %c383_i32 dim 1 : vector<8x384xf32>, i32 -> vector<8x384xf32>
    %c367_i32 = arith.constant 367 : i32
    %10 = tpu.dynamic_rotate %2 by %c367_i32 dim 1 : vector<8x384xf32>, i32 -> vector<8x384xf32>
    %c366_i32 = arith.constant 366 : i32
    %11 = tpu.dynamic_rotate %2 by %c366_i32 dim 1 : vector<8x384xf32>, i32 -> vector<8x384xf32>
    %c365_i32 = arith.constant 365 : i32
    %12 = tpu.dynamic_rotate %2 by %c365_i32 dim 1 : vector<8x384xf32>, i32 -> vector<8x384xf32>
    %13 = tpu.concatenate %5, %6, %7, %8, %2, %9, %10, %11, %12 in 0 : vector<8x384xf32>, vector<8x384xf32>, vector<8x384xf32>, vector<8x384xf32>, vector<8x384xf32>, vector<8x384xf32>, vector<8x384xf32>, vector<8x384xf32>, vector<8x384xf32> -> vector<72x384xf32>
    %cst = arith.constant dense<0.000000e+00> : vector<8x384xf32>
    %14 = tpu.matmul %3, %13, %cst {dimension_numbers = #tpu.dot_dimension_numbers<[1], [0], [0], [1], [0, 0, 1, 1], [], []>} : vector<8x72xf32>, vector<72x384xf32>, vector<8x384xf32> -> vector<8x384xf32>
    %15 = vector.broadcast %4 : vector<8x1xf32> to vector<8x384xf32>
    %16 = arith.addf %14, %15 : vector<8x384xf32>
    %cst_8 = arith.constant 0.000000e+00 : f32
    %17 = vector.broadcast %cst_8 : f32 to vector<8x384xf32>
    %18 = arith.maximumf %16, %17 : vector<8x384xf32>
    %19 = vector.broadcast %0 : vector<1x384xf32> to vector<8x384xf32>
    %20 = arith.mulf %18, %19 : vector<8x384xf32>
    %c0_9 = arith.constant 0 : index
    %c0_10 = arith.constant 0 : index
    %21 = vector.load %arg8[%c0_9, %c0_10] : memref<16x384xf32, #tpu.memory_space<vmem>>, vector<8x384xf32>
    tpu.vector_store %arg8[%c0_9, %c0_10], %20 {strides = array<i32>} : memref<16x384xf32, #tpu.memory_space<vmem>>, vector<8x384xf32>,
    %c0_11 = arith.constant 0 : index
    %c0_12 = arith.constant 0 : index
    %22 = vector.load %arg8[%c0_11, %c0_12] : memref<16x384xf32, #tpu.memory_space<vmem>>, vector<8x384xf32>
    %c0_13 = arith.constant 0 : index
    %c0_14 = arith.constant 0 : index
    %23 = vector.load %arg5[%c0_13, %c0_14] : memref<16x72xf32, #tpu.memory_space<vmem>>, vector<16x72xf32>
    %c0_15 = arith.constant 0 : index
    %c0_16 = arith.constant 0 : index
    %24 = vector.load %arg6[%c0_15, %c0_16] : memref<16x1xf32, #tpu.memory_space<vmem>>, vector<16x1xf32>
    %c19_i32_17 = arith.constant 19 : i32
    %25 = tpu.dynamic_rotate %22 by %c19_i32_17 dim 1 : vector<8x384xf32>, i32 -> vector<8x384xf32>
    %c18_i32_18 = arith.constant 18 : i32
    %26 = tpu.dynamic_rotate %22 by %c18_i32_18 dim 1 : vector<8x384xf32>, i32 -> vector<8x384xf32>
    %c17_i32_19 = arith.constant 17 : i32
    %27 = tpu.dynamic_rotate %22 by %c17_i32_19 dim 1 : vector<8x384xf32>, i32 -> vector<8x384xf32>
    %c1_i32_20 = arith.constant 1 : i32
    %28 = tpu.dynamic_rotate %22 by %c1_i32_20 dim 1 : vector<8x384xf32>, i32 -> vector<8x384xf32>
    %c383_i32_21 = arith.constant 383 : i32
    %29 = tpu.dynamic_rotate %22 by %c383_i32_21 dim 1 : vector<8x384xf32>, i32 -> vector<8x384xf32>
    %c367_i32_22 = arith.constant 367 : i32
    %30 = tpu.dynamic_rotate %22 by %c367_i32_22 dim 1 : vector<8x384xf32>, i32 -> vector<8x384xf32>
    %c366_i32_23 = arith.constant 366 : i32
    %31 = tpu.dynamic_rotate %22 by %c366_i32_23 dim 1 : vector<8x384xf32>, i32 -> vector<8x384xf32>
    %c365_i32_24 = arith.constant 365 : i32
    %32 = tpu.dynamic_rotate %22 by %c365_i32_24 dim 1 : vector<8x384xf32>, i32 -> vector<8x384xf32>
    %33 = tpu.concatenate %25, %26, %27, %28, %22, %29, %30, %31, %32 in 0 : vector<8x384xf32>, vector<8x384xf32>, vector<8x384xf32>, vector<8x384xf32>, vector<8x384xf32>, vector<8x384xf32>, vector<8x384xf32>, vector<8x384xf32>, vector<8x384xf32> -> vector<72x384xf32>
    %cst_25 = arith.constant dense<0.000000e+00> : vector<16x384xf32>
    %34 = tpu.matmul %23, %33, %cst_25 {dimension_numbers = #tpu.dot_dimension_numbers<[1], [0], [0], [1], [0, 0, 1, 1], [], []>} : vector<16x72xf32>, vector<72x384xf32>, vector<16x384xf32> -> vector<16x384xf32>
    %35 = vector.broadcast %24 : vector<16x1xf32> to vector<16x384xf32>
    %36 = arith.addf %34, %35 : vector<16x384xf32>
    %cst_26 = arith.constant 0.000000e+00 : f32
    %37 = vector.broadcast %cst_26 : f32 to vector<16x384xf32>
    %38 = arith.maximumf %36, %37 : vector<16x384xf32>
    %39 = vector.broadcast %0 : vector<1x384xf32> to vector<16x384xf32>
    %40 = arith.mulf %38, %39 : vector<16x384xf32>
    %c0_27 = arith.constant 0 : index
    %c0_28 = arith.constant 0 : index
    %c0_29 = arith.constant 0 : index
    %41 = vector.load %arg7[%c0_27, %c0_28, %c0_29] : memref<1x16x384xf32, #tpu.memory_space<vmem>>, vector<1x16x384xf32>
    %42 = vector.shape_cast %41 : vector<1x16x384xf32> to vector<16x384xf32>
    %43 = vector.shape_cast %40 : vector<16x384xf32> to vector<1x16x384xf32>
    tpu.vector_store %arg7[%c0_27, %c0_28, %c0_29], %43 {strides = array<i32>} : memref<1x16x384xf32, #tpu.memory_space<vmem>>, vector<1x16x384xf32>,
    return
  }
  func.func @transform_0(%arg0: i32) -> (i32, i32, i32) {
    %c0_i32 = arith.constant 0 : i32
    %c0_i32_0 = arith.constant 0 : i32
    %c0_i32_1 = arith.constant 0 : i32
    return %arg0, %c0_i32, %c0_i32_0 : i32, i32, i32
  }
  func.func @transform_1(%arg0: i32) -> (i32, i32) {
    %c0_i32 = arith.constant 0 : i32
    %c0_i32_0 = arith.constant 0 : i32
    %c0_i32_1 = arith.constant 0 : i32
    return %c0_i32, %c0_i32_0 : i32, i32
  }
  func.func @transform_2(%arg0: i32) -> (i32, i32) {
    %c0_i32 = arith.constant 0 : i32
    %c0_i32_0 = arith.constant 0 : i32
    %c0_i32_1 = arith.constant 0 : i32
    return %c0_i32, %c0_i32_0 : i32, i32
  }
  func.func @transform_3(%arg0: i32) -> (i32, i32) {
    %c0_i32 = arith.constant 0 : i32
    %c0_i32_0 = arith.constant 0 : i32
    %c0_i32_1 = arith.constant 0 : i32
    return %c0_i32, %c0_i32_0 : i32, i32
  }
  func.func @transform_4(%arg0: i32) -> (i32, i32) {
    %c0_i32 = arith.constant 0 : i32
    %c0_i32_0 = arith.constant 0 : i32
    %c0_i32_1 = arith.constant 0 : i32
    return %c0_i32, %c0_i32_0 : i32, i32
  }
  func.func @transform_5(%arg0: i32) -> (i32, i32) {
    %c0_i32 = arith.constant 0 : i32
    %c0_i32_0 = arith.constant 0 : i32
    %c0_i32_1 = arith.constant 0 : i32
    return %c0_i32, %c0_i32_0 : i32, i32
  }
  func.func @transform_6(%arg0: i32) -> (i32, i32, i32) {
    %c0_i32 = arith.constant 0 : i32
    %c0_i32_0 = arith.constant 0 : i32
    %c0_i32_1 = arith.constant 0 : i32
    return %arg0, %c0_i32, %c0_i32_0 : i32, i32, i32
  }
}

</mosaic_0001>

<llo_original>
// kernel: cam_layers_forward.1
$region0: #{cam_layers_forward.1}
  #allocation0 [shape = 'u32[]', space=smem, size = 0x4, offset = 0x4, fixed_abs, tag = 'smem constant byte address 0x4 - core index']
  #allocation1 [shape = 'u32[144,128]{1,0:T(1,128)}', space=vmem, size = 0x12000, scoped, tag = 'internal scratch']
  #allocation2 [shape = 'f32[16,384]{1,0:T(8,128)}', space=vmem, size = 0x6000, scoped, tag = 'scratch operand']
  #allocation3 [shape = 'f32[16,384]{1,0:T(8,128)}', space=vmem, size = 0x6000, scoped, tag = 'scratch operand']
  %s0 = inlined_call_operand.vmem [shape: f32[2,8,384], index: 0, kind: input, shape index: {}]
  %s1 = inlined_call_operand.vmem [shape: f32[1,384], index: 1, kind: input, shape index: {}]
  %s2 = inlined_call_operand.vmem [shape: f32[8,72], index: 2, kind: input, shape index: {}]
  %s3 = inlined_call_operand.vmem [shape: f32[8,1], index: 3, kind: input, shape index: {}]
  %s4 = inlined_call_operand.vmem [shape: f32[16,72], index: 4, kind: input, shape index: {}]
  %s5 = inlined_call_operand.vmem [shape: f32[16,1], index: 5, kind: input, shape index: {}]
  %s6 = inlined_call_operand.vmem [shape: f32[2,16,384], index: 6, kind: output, shape index: {}]
  %s7 = sld [smem:[#allocation0]]
  $region57: #{cam_layers_forward.1} parent=0
    _
  %s9 = ssub.s32 1, %s7
  %s10 = scalar_select 0, %s9, %s7
  loop: start=0, step=1, limit=4
  $region2: #{cam_layers_forward.1} parent=0 // loop_pre_header
    _
  $region3: #{cam_layers_forward.1} parent=0 // loop_header
    %s12 = sphi 0, %s16
    %p13 = scmp.ge.s32.totalorder %s12, 4
    %s22 = sphi 0, %s24
    %s25 = sphi 0, %s22
    %s26 = sphi 0, %s25
    %s42 = sphi 0, %s26
    %s46 = sphi 0, %s46
    %s48 = sphi 0, %s46
    %s49 = sphi 0, %s48
    %s63 = sphi 0, %s49
    %s67 = sphi 0, %s67
    %s69 = sphi 0, %s67
    %s70 = sphi 0, %s69
    %s84 = sphi 0, %s70
    %s88 = sphi 0, %s88
    %s90 = sphi 0, %s88
    %s91 = sphi 0, %s90
    %s105 = sphi 0, %s91
    %s109 = sphi 0, %s109
    %s111 = sphi 0, %s109
    %s112 = sphi 0, %s111
    %s126 = sphi 0, %s112
    %s130 = sphi 0, %s130
    %s132 = sphi 0, %s130
    %s133 = sphi 0, %s132
    %s147 = sphi 0, %s133
    %s153 = sphi 0, %s155
    %s156 = sphi 0, %s153
    %s157 = sphi 0, %s156
    %s173 = sphi 0, %s157
  $region4: #{cam_layers_forward.1} parent=0 // loop_header_branch
    %15 = sbr.rel (%p13) target = $region8
  $region5: #{cam_layers_forward.1} parent=0 // loop_body
    %s17 = ssub.s32 %s12, 1
    %s18 = ssub.s32 %s12, 2
    %s19 = sadd.s32 %s12, 1
    %s20 = ssub.s32 %s12, %s19
    %p21 = scmp.eq.s32.totalorder %s20, 0
    %s23 = sadd.s32 %s22, 1
    %s24 = scalar_select %p21, %s22, %s23
    %p27 = pneg %p21
    %p28 = scmp.eq.s32.totalorder %s12, 1
    %p29 = por %p27, %p28
    %p30 = scmp.ne.s32.totalorder %s22, %s25
    %p31 = scmp.eq.s32.totalorder %s12, 0
    %p32 = por %p30, %p31
    %p33 = scmp.ne.s32.totalorder %s22, %s25
    %p34 = scmp.eq.s32.totalorder %s17, 1
    %p35 = por %p33, %p34
    %p36 = scmp.ne.s32.totalorder %s25, %s26
    %p37 = scmp.eq.s32.totalorder %s17, 0
    %p38 = por %p36, %p37
    %p39 = scmp.ne.s32.totalorder %s25, %s26
    %p40 = scmp.eq.s32.totalorder %s18, 1
    %p41 = por %p39, %p40
    %p43 = scmp.ne.s32.totalorder %s26, %s42
    %p44 = scmp.eq.s32.totalorder %s18, 0
    %p45 = por %p43, %p44
    %s47 = sadd.s32 %s46, 1
    %p50 = scmp.eq.s32.totalorder %s12, 1
    %p51 = scmp.ne.s32.totalorder %s46, %s48
    %p52 = scmp.eq.s32.totalorder %s12, 0
    %p53 = por %p51, %p52
    %p54 = scmp.ne.s32.totalorder %s46, %s48
    %p55 = scmp.eq.s32.totalorder %s17, 1
    %p56 = por %p54, %p55
    %p57 = scmp.ne.s32.totalorder %s48, %s49
    %p58 = scmp.eq.s32.totalorder %s17, 0
    %p59 = por %p57, %p58
    %p60 = scmp.ne.s32.totalorder %s48, %s49
    %p61 = scmp.eq.s32.totalorder %s18, 1
    %p62 = por %p60, %p61
    %p64 = scmp.ne.s32.totalorder %s49, %s63
    %p65 = scmp.eq.s32.totalorder %s18, 0
    %p66 = por %p64, %p65
    %s68 = sadd.s32 %s67, 1
    %p71 = scmp.eq.s32.totalorder %s12, 1
    %p72 = scmp.ne.s32.totalorder %s67, %s69
    %p73 = scmp.eq.s32.totalorder %s12, 0
    %p74 = por %p72, %p73
    %p75 = scmp.ne.s32.totalorder %s67, %s69
    %p76 = scmp.eq.s32.totalorder %s17, 1
    %p77 = por %p75, %p76
    %p78 = scmp.ne.s32.totalorder %s69, %s70
    %p79 = scmp.eq.s32.totalorder %s17, 0
    %p80 = por %p78, %p79
    %p81 = scmp.ne.s32.totalorder %s69, %s70
    %p82 = scmp.eq.s32.totalorder %s18, 1
    %p83 = por %p81, %p82
    %p85 = scmp.ne.s32.totalorder %s70, %s84
    %p86 = scmp.eq.s32.totalorder %s18, 0
    %p87 = por %p85, %p86
    %s89 = sadd.s32 %s88, 1
    %p92 = scmp.eq.s32.totalorder %s12, 1
    %p93 = scmp.ne.s32.totalorder %s88, %s90
    %p94 = scmp.eq.s32.totalorder %s12, 0
    %p95 = por %p93, %p94
    %p96 = scmp.ne.s32.totalorder %s88, %s90
    %p97 = scmp.eq.s32.totalorder %s17, 1
    %p98 = por %p96, %p97
    %p99 = scmp.ne.s32.totalorder %s90, %s91
    %p100 = scmp.eq.s32.totalorder %s17, 0
    %p101 = por %p99, %p100
    %p102 = scmp.ne.s32.totalorder %s90, %s91
    %p103 = scmp.eq.s32.totalorder %s18, 1
    %p104 = por %p102, %p103
    %p106 = scmp.ne.s32.totalorder %s91, %s105
    %p107 = scmp.eq.s32.totalorder %s18, 0
    %p108 = por %p106, %p107
    %s110 = sadd.s32 %s109, 1
    %p113 = scmp.eq.s32.totalorder %s12, 1
    %p114 = scmp.ne.s32.totalorder %s109, %s111
    %p115 = scmp.eq.s32.totalorder %s12, 0
    %p116 = por %p114, %p115
    %p117 = scmp.ne.s32.totalorder %s109, %s111
    %p118 = scmp.eq.s32.totalorder %s17, 1
    %p119 = por %p117, %p118
    %p120 = scmp.ne.s32.totalorder %s111, %s112
    %p121 = scmp.eq.s32.totalorder %s17, 0
    %p122 = por %p120, %p121
    %p123 = scmp.ne.s32.totalorder %s111, %s112
    %p124 = scmp.eq.s32.totalorder %s18, 1
    %p125 = por %p123, %p124
    %p127 = scmp.ne.s32.totalorder %s112, %s126
    %p128 = scmp.eq.s32.totalorder %s18, 0
    %p129 = por %p127, %p128
    %s131 = sadd.s32 %s130, 1
    %p134 = scmp.eq.s32.totalorder %s12, 1
    %p135 = scmp.ne.s32.totalorder %s130, %s132
    %p136 = scmp.eq.s32.totalorder %s12, 0
    %p137 = por %p135, %p136
    %p138 = scmp.ne.s32.totalorder %s130, %s132
    %p139 = scmp.eq.s32.totalorder %s17, 1
    %p140 = por %p138, %p139
    %p141 = scmp.ne.s32.totalorder %s132, %s133
    %p142 = scmp.eq.s32.totalorder %s17, 0
    %p143 = por %p141, %p142
    %p144 = scmp.ne.s32.totalorder %s132, %s133
    %p145 = scmp.eq.s32.totalorder %s18, 1
    %p146 = por %p144, %p145
    %p148 = scmp.ne.s32.totalorder %s133, %s147
    %p149 = scmp.eq.s32.totalorder %s18, 0
    %p150 = por %p148, %p149
    %s151 = ssub.s32 %s12, %s19
    %p152 = scmp.eq.s32.totalorder %s151, 0
    %s154 = sadd.s32 %s153, 1
    %s155 = scalar_select %p152, %s153, %s154
    %p158 = pneg %p152
    %p159 = scmp.eq.s32.totalorder %s12, 1
    %p160 = por %p158, %p159
    %p161 = scmp.ne.s32.totalorder %s153, %s156
    %p162 = scmp.eq.s32.totalorder %s12, 0
    %p163 = por %p161, %p162
    %p164 = scmp.ne.s32.totalorder %s153, %s156
    %p165 = scmp.eq.s32.totalorder %s17, 1
    %p166 = por %p164, %p165
    %p167 = scmp.ne.s32.totalorder %s156, %s157
    %p168 = scmp.eq.s32.totalorder %s17, 0
    %p169 = por %p167, %p168
    %p170 = scmp.ne.s32.totalorder %s156, %s157
    %p171 = scmp.eq.s32.totalorder %s18, 1
    %p172 = por %p170, %p171
    %p174 = scmp.ne.s32.totalorder %s157, %s173
    %p175 = scmp.eq.s32.totalorder %s18, 0
    %p176 = por %p174, %p175
    %p177 = scmp.le.s32.totalorder 1, %s12
    %p178 = scmp.lt.s32.totalorder %s12, 3
    %p179 = pnand %p177, %p178
    %p180 = pneg %p179
    // Predicated region
    $region9: #{cam_layers_forward.1} parent=5 // pred_check
      _
    $region10: #{cam_layers_forward.1} parent=5 // pred_check_branch
      %182 = sbr.rel (%p179) target = $region12
    $region11: #{cam_layers_forward.1} parent=5 // pred_region
      %s183 = ssub.s32 %s12, 1
      // Predicated region
      $region13: #{cam_layers_forward.1} parent=11 // pred_check
        %p184 = pneg %p59
      $region14: #{cam_layers_forward.1} parent=11 // pred_check_branch
        %186 = sbr.rel (%p184) target = $region16
      $region15: #{cam_layers_forward.1} parent=11 // pred_region
        _
      $region16: #{cam_layers_forward.1} parent=11 // pred_fallthru
        _
      // Predicated region
      $region17: #{cam_layers_forward.1} parent=11 // pred_check
        %p187 = pneg %p80
      $region18: #{cam_layers_forward.1} parent=11 // pred_check_branch
        %189 = sbr.rel (%p187) target = $region20
      $region19: #{cam_layers_forward.1} parent=11 // pred_region
        _
      $region20: #{cam_layers_forward.1} parent=11 // pred_fallthru
        _
      // Predicated region
      $region21: #{cam_layers_forward.1} parent=11 // pred_check
        %p190 = pneg %p101
      $region22: #{cam_layers_forward.1} parent=11 // pred_check_branch
        %192 = sbr.rel (%p190) target = $region24
      $region23: #{cam_layers_forward.1} parent=11 // pred_region
        _
      $region24: #{cam_layers_forward.1} parent=11 // pred_fallthru
        _
      // Predicated region
      $region25: #{cam_layers_forward.1} parent=11 // pred_check
        %p193 = pneg %p122
      $region26: #{cam_layers_forward.1} parent=11 // pred_check_branch
        %195 = sbr.rel (%p193) target = $region28
      $region27: #{cam_layers_forward.1} parent=11 // pred_region
        _
      $region28: #{cam_layers_forward.1} parent=11 // pred_fallthru
        _
      // Predicated region
      $region29: #{cam_layers_forward.1} parent=11 // pred_check
        %p196 = pneg %p143
      $region30: #{cam_layers_forward.1} parent=11 // pred_check_branch
        %198 = sbr.rel (%p196) target = $region32
      $region31: #{cam_layers_forward.1} parent=11 // pred_region
        _
      $region32: #{cam_layers_forward.1} parent=11 // pred_fallthru
        _
    $region12: #{cam_layers_forward.1} parent=5 // pred_fallthru
      _
    %p199 = scmp.lt.s32.totalorder %s12, 2
    // Predicated region
    $region33: #{cam_layers_forward.1} parent=5 // pred_check
      %p200 = pneg %p199
    $region34: #{cam_layers_forward.1} parent=5 // pred_check_branch
      %202 = sbr.rel (%p200) target = $region36
    $region35: #{cam_layers_forward.1} parent=5 // pred_region
      // Predicated region
      $region37: #{cam_layers_forward.1} parent=35 // pred_check
        %p203 = pneg %p32
      $region38: #{cam_layers_forward.1} parent=35 // pred_check_branch
        %205 = sbr.rel (%p203) target = $region40
      $region39: #{cam_layers_forward.1} parent=35 // pred_region
        %p206 = scmp.lt.s32.totalorder %s12, 1
        %s207 = scalar_select %p206, %s12, 1
        %s208 = smul.addr %s207, 3
        %s209 = smul.addr %s208, 8
        %s210 = scalar_lea.vmem %s0, %s209
      $region40: #{cam_layers_forward.1} parent=35 // pred_fallthru
        _
    $region36: #{cam_layers_forward.1} parent=5 // pred_fallthru
      _
    %p211 = scmp.le.s32.totalorder 1, %s12
    %p212 = scmp.lt.s32.totalorder %s12, 3
    %p213 = pnand %p211, %p212
    %p214 = pneg %p213
    // Predicated region
    $region41: #{cam_layers_forward.1} parent=5 // pred_check
      _
    $region42: #{cam_layers_forward.1} parent=5 // pred_check_branch
      %216 = sbr.rel (%p213) target = $region44
    $region43: #{cam_layers_forward.1} parent=5 // pred_region
      %s217 = ssub.s32 %s12, 1
      %p218 = scmp.lt.s32.totalorder %s17, 1
      %s219 = scalar_select %p218, %s17, 1
      %s220 = smul.addr %s219, 3
      %s221 = smul.addr %s220, 8
      %s222 = scalar_lea.vmem %s0, %s221
      %p223 = pneg %p38
      %p224 = pneg %p35
      %p225 = pneg %p59
      %p226 = pneg %p56
      %p227 = pneg %p80
      %p228 = pneg %p77
      %p229 = pneg %p101
      %p230 = pneg %p98
      %p231 = pneg %p122
      %p232 = pneg %p119
      %p233 = pneg %p143
      %p234 = pneg %p140
      %p235 = pneg %p169
      %p236 = pneg %p166
      %p237 = scmp.lt.s32.totalorder %s17, 1
      %s238 = scalar_select %p237, %s17, 1
      %s239 = smul.addr %s238, 6
      %s240 = smul.addr %s239, 8
      %s241 = scalar_lea.vmem %s6, %s240
      %p242 = scmp.lt.s32.totalorder %s17, 1
      %s243 = scalar_select %p242, %s17, 1
      %s244 = smul.addr %s243, 3
      %s245 = smul.addr %s244, 8
      %s246 = scalar_lea.vmem %s0, %s245
      %p247 = scmp.lt.s32.totalorder %s17, 1
      %s248 = scalar_select %p247, %s17, 1
      %s249 = smul.addr %s248, 6
      %s250 = smul.addr %s249, 8
      %s251 = scalar_lea.vmem %s6, %s250
      %v252 = vld [vmem:[%s1] sm:$0x7]
      %v253 = vld [vmem:[%s246] sm:$0xff]
      %v254 = vld [vmem:[%s246 + $0x8] sm:$0xff]
      %v255 = vld [vmem:[%s246 + $0x10] sm:$0xff]
      %v256 = vld [vmem:[%s2] sm:$0xff]
      %v257 = vld [vmem:[%s3] sm:$0xff]
      %258 = vrot.lane.b32.xlu0 %v253, 19
      %v259 = vpop.permute.xlu0 %258
      %260 = vrot.lane.b32.xlu0 %v254, 19
      %v261 = vpop.permute.xlu0 %260
      %262 = vrot.lane.b32.xlu0 %v255, 19
      %v263 = vpop.permute.xlu0 %262
      %v264 = vlaneseq
      %v265 = vand.u32 %v264, 127
      %vm266 = vcmp.lt.s32.totalorder %v265, 19
      %v267 = vsel %vm266, %v261, %v263
      %v268 = vsel %vm266, %v259, %v261
      %v269 = vsel %vm266, %v263, %v259
      %270 = vrot.lane.b32.xlu0 %v253, 18
      %v271 = vpop.permute.xlu0 %270
      %272 = vrot.lane.b32.xlu0 %v254, 18
      %v273 = vpop.permute.xlu0 %272
      %274 = vrot.lane.b32.xlu0 %v255, 18
      %v275 = vpop.permute.xlu0 %274
      %vm276 = vcmp.lt.s32.totalorder %v265, 18
      %v277 = vsel %vm276, %v273, %v275
      %v278 = vsel %vm276, %v271, %v273
      %v279 = vsel %vm276, %v275, %v271
      %280 = vrot.lane.b32.xlu0 %v253, 17
      %v281 = vpop.permute.xlu0 %280
      %282 = vrot.lane.b32.xlu0 %v254, 17
      %v283 = vpop.permute.xlu0 %282
      %284 = vrot.lane.b32.xlu0 %v255, 17
      %v285 = vpop.permute.xlu0 %284
      %vm286 = vcmp.lt.s32.totalorder %v265, 17
      %v287 = vsel %vm286, %v283, %v285
      %v288 = vsel %vm286, %v281, %v283
      %v289 = vsel %vm286, %v285, %v281
      %290 = vrot.lane.b32.xlu0 %v253, 1
      %v291 = vpop.permute.xlu0 %290
      %292 = vrot.lane.b32.xlu0 %v254, 1
      %v293 = vpop.permute.xlu0 %292
      %294 = vrot.lane.b32.xlu0 %v255, 1
      %v295 = vpop.permute.xlu0 %294
      %vm296 = vcmp.lt.s32.totalorder %v265, 1
      %v297 = vsel %vm296, %v293, %v295
      %v298 = vsel %vm296, %v291, %v293
      %v299 = vsel %vm296, %v295, %v291
      %300 = vrot.lane.b32.xlu0 %v253, 127
      %v301 = vpop.permute.xlu0 %300
      %302 = vrot.lane.b32.xlu0 %v254, 127
      %v303 = vpop.permute.xlu0 %302
      %304 = vrot.lane.b32.xlu0 %v255, 127
      %v305 = vpop.permute.xlu0 %304
      %vm306 = vcmp.lt.s32.totalorder %v265, 127
      %v307 = vsel %vm306, %v303, %v305
      %v308 = vsel %vm306, %v301, %v303
      %v309 = vsel %vm306, %v305, %v301
      %310 = vrot.lane.b32.xlu0 %v253, 111
      %v311 = vpop.permute.xlu0 %310
      %312 = vrot.lane.b32.xlu0 %v254, 111
      %v313 = vpop.permute.xlu0 %312
      %314 = vrot.lane.b32.xlu0 %v255, 111
      %v315 = vpop.permute.xlu0 %314
      %vm316 = vcmp.lt.s32.totalorder %v265, 111
      %v317 = vsel %vm316, %v313, %v315
      %v318 = vsel %vm316, %v311, %v313
      %v319 = vsel %vm316, %v315, %v311
      %320 = vrot.lane.b32.xlu0 %v253, 110
      %v321 = vpop.permute.xlu0 %320
      %322 = vrot.lane.b32.xlu0 %v254, 110
      %v323 = vpop.permute.xlu0 %322
      %324 = vrot.lane.b32.xlu0 %v255, 110
      %v325 = vpop.permute.xlu0 %324
      %vm326 = vcmp.lt.s32.totalorder %v265, 110
      %v327 = vsel %vm326, %v323, %v325
      %v328 = vsel %vm326, %v321, %v323
      %v329 = vsel %vm326, %v325, %v321
      %330 = vrot.lane.b32.xlu0 %v253, 109
      %v331 = vpop.permute.xlu0 %330
      %332 = vrot.lane.b32.xlu0 %v254, 109
      %v333 = vpop.permute.xlu0 %332
      %334 = vrot.lane.b32.xlu0 %v255, 109
      %v335 = vpop.permute.xlu0 %334
      %vm336 = vcmp.lt.s32.totalorder %v265, 109
      %v337 = vsel %vm336, %v333, %v335
      %v338 = vsel %vm336, %v331, %v333
      %v339 = vsel %vm336, %v335, %v331
      %341 = vset.pattern.permute.xlu0 0
      %342 = vperm.xlu0 %341, %v257
      %v343 = vpop.permute.xlu0 %342
      %vm345 = vcmask 588800
      %v347 = vsel %vm345, %v256, 0
      %349 = vmatprep.subr.mxu0 0.0
      %350 = vmatpush1.msra.mxu0 0.0
      %351 = vmatprep.subr.mxu0 0.0
      %352 = vmatpush1.msra.mxu0 0.0
      %353 = vmatprep.subr.mxu0 0.0
      %354 = vmatpush1.msra.mxu0 0.0
      %355 = vmatprep.subr.mxu0 0.0
      %356 = vmatpush1.msra.mxu0 0.0
      %357 = vmatprep.subr.mxu0 0.0
      %358 = vmatpush1.msra.mxu0 0.0
      %359 = vmatprep.subr.mxu0 0.0
      %360 = vmatpush1.msra.mxu0 0.0
      %361 = vmatprep.subr.mxu0 0.0
      %362 = vmatpush1.msra.mxu0 0.0
      %363 = vmatprep.subr.mxu0 %v337
      %364 = vmatpush1.msra.mxu0 %v338
      %365 = vmatprep.subr.mxu0 %v327
      %366 = vmatpush1.msra.mxu0 %v328
      %367 = vmatprep.subr.mxu0 %v317
      %368 = vmatpush1.msra.mxu0 %v318
      %369 = vmatprep.subr.mxu0 %v307
      %370 = vmatpush1.msra.mxu0 %v308
      %371 = vmatprep.subr.mxu0 %v254
      %372 = vmatpush1.msra.mxu0 %v253
      %373 = vmatprep.subr.mxu0 %v298
      %374 = vmatpush1.msra.mxu0 %v299
      %375 = vmatprep.subr.mxu0 %v288
      %376 = vmatpush1.msra.mxu0 %v289
      %377 = vmatprep.subr.mxu0 %v278
      %378 = vmatpush1.msra.mxu0 %v279
      %379 = vmatprep.subr.mxu0 %v268
      %380 = vmatpush1.msra.mxu0 %v269
      %381 = vmatprep.subr.mxu0 0.0
      %382 = vmatpush2.msra.mxu0 0.0
      %383 = vmatprep.subr.mxu0 0.0
      %384 = vmatpush2.msra.mxu0 0.0
      %385 = vmatprep.subr.mxu0 0.0
      %386 = vmatpush2.msra.mxu0 0.0
      %387 = vmatprep.subr.mxu0 0.0
      %388 = vmatpush2.msra.mxu0 0.0
      %389 = vmatprep.subr.mxu0 0.0
      %390 = vmatpush2.msra.mxu0 0.0
      %391 = vmatprep.subr.mxu0 0.0
      %392 = vmatpush2.msra.mxu0 0.0
      %393 = vmatprep.subr.mxu0 0.0
      %394 = vmatpush2.msra.mxu0 0.0
      %395 = vmatprep.subr.mxu0 0.0
      %396 = vmatpush2.msra.mxu0 0.0
      %397 = vmatprep.subr.mxu0 0.0
      %398 = vmatpush2.msra.mxu0 0.0
      %399 = vmatprep.subr.mxu0 0.0
      %400 = vmatpush2.msra.mxu0 0.0
      %401 = vmatprep.subr.mxu0 0.0
      %402 = vmatpush2.msra.mxu0 0.0
      %403 = vmatprep.subr.mxu0 0.0
      %404 = vmatpush2.msra.mxu0 0.0
      %405 = vmatprep.subr.mxu0 0.0
      %406 = vmatpush2.msra.mxu0 0.0
      %407 = vmatprep.subr.mxu0 0.0
      %408 = vmatpush2.msra.mxu0 0.0
      %409 = vmatprep.subr.mxu0 0.0
      %410 = vmatpush2.msra.mxu0 0.0
      %411 = vmatprep.subr.mxu0 0.0
      %412 = vmatpush2.msra.mxu0 0.0
      %413 = vmatprep.mubr.f32.mxu0 0.0
      %414 = vmatmul.mubr.f32.gmra.mxu0 %v347
      %v415 = vpop.f32.mrf.mxu0
      %v416 = vadd.f32 %v343, %v415
      %v417 = vpop.f32.mrf.mxu0
      %v418 = vadd.f32 %v343, %v417
      %419 = vdwg.mxu0
      %420 = vmatprep.subr.mxu0 0.0
      %421 = vmatpush1.msra.mxu0 0.0
      %422 = vmatprep.subr.mxu0 0.0
      %423 = vmatpush1.msra.mxu0 0.0
      %424 = vmatprep.subr.mxu0 0.0
      %425 = vmatpush1.msra.mxu0 0.0
      %426 = vmatprep.subr.mxu0 0.0
      %427 = vmatpush1.msra.mxu0 0.0
      %428 = vmatprep.subr.mxu0 0.0
      %429 = vmatpush1.msra.mxu0 0.0
      %430 = vmatprep.subr.mxu0 0.0
      %431 = vmatpush1.msra.mxu0 0.0
      %432 = vmatprep.subr.mxu0 0.0
      %433 = vmatpush1.msra.mxu0 0.0
      %434 = vmatprep.subr.mxu0 0.0
      %435 = vmatpush1.msra.mxu0 %v339
      %436 = vmatprep.subr.mxu0 0.0
      %437 = vmatpush1.msra.mxu0 %v329
      %438 = vmatprep.subr.mxu0 0.0
      %439 = vmatpush1.msra.mxu0 %v319
      %440 = vmatprep.subr.mxu0 0.0
      %441 = vmatpush1.msra.mxu0 %v309
      %442 = vmatprep.subr.mxu0 0.0
      %443 = vmatpush1.msra.mxu0 %v255
      %444 = vmatprep.subr.mxu0 0.0
      %445 = vmatpush1.msra.mxu0 %v297
      %446 = vmatprep.subr.mxu0 0.0
      %447 = vmatpush1.msra.mxu0 %v287
      %448 = vmatprep.subr.mxu0 0.0
      %449 = vmatpush1.msra.mxu0 %v277
      %450 = vmatprep.subr.mxu0 0.0
      %451 = vmatpush1.msra.mxu0 %v267
      %452 = vmatprep.subr.mxu0 0.0
      %453 = vmatpush2.msra.mxu0 0.0
      %454 = vmatprep.subr.mxu0 0.0
      %455 = vmatpush2.msra.mxu0 0.0
      %456 = vmatprep.subr.mxu0 0.0
      %457 = vmatpush2.msra.mxu0 0.0
      %458 = vmatprep.subr.mxu0 0.0
      %459 = vmatpush2.msra.mxu0 0.0
      %460 = vmatprep.subr.mxu0 0.0
      %461 = vmatpush2.msra.mxu0 0.0
      %462 = vmatprep.subr.mxu0 0.0
      %463 = vmatpush2.msra.mxu0 0.0
      %464 = vmatprep.subr.mxu0 0.0
      %465 = vmatpush2.msra.mxu0 0.0
      %466 = vmatprep.subr.mxu0 0.0
      %467 = vmatpush2.msra.mxu0 0.0
      %468 = vmatprep.subr.mxu0 0.0
      %469 = vmatpush2.msra.mxu0 0.0
      %470 = vmatprep.subr.mxu0 0.0
      %471 = vmatpush2.msra.mxu0 0.0
      %472 = vmatprep.subr.mxu0 0.0
      %473 = vmatpush2.msra.mxu0 0.0
      %474 = vmatprep.subr.mxu0 0.0
      %475 = vmatpush2.msra.mxu0 0.0
      %476 = vmatprep.subr.mxu0 0.0
      %477 = vmatpush2.msra.mxu0 0.0
      %478 = vmatprep.subr.mxu0 0.0
      %479 = vmatpush2.msra.mxu0 0.0
      %480 = vmatprep.subr.mxu0 0.0
      %481 = vmatpush2.msra.mxu0 0.0
      %482 = vmatprep.subr.mxu0 0.0
      %483 = vmatpush2.msra.mxu0 0.0
      %484 = vmatprep.mubr.f32.mxu0 0.0
      %485 = vmatmul.mubr.f32.gmra.mxu0 %v347
      %v486 = vpop.f32.mrf.mxu0
      %v487 = vadd.f32 %v343, %v486
      %v488 = vpop.f32.mrf.mxu0
      %489 = vdwg.mxu0
      %v490 = vmax.f32 %v416, 0.0
      %v491 = vmax.f32 %v418, 0.0
      %v492 = vmax.f32 %v487, 0.0
      %v494 = vlaneseq
      %v495 = vshrl.u32 %v494, 7
      %v496 = vsub.s32 0, %v495
      %v497 = vrot.slane %v252, %v496
      %v498 = vlaneseq
      %v499 = vshrl.u32 %v498, 7
      %v500 = vsub.s32 1, %v499
      %v501 = vrot.slane %v252, %v500
      %v502 = vlaneseq
      %v503 = vshrl.u32 %v502, 7
      %v504 = vsub.s32 2, %v503
      %v505 = vrot.slane %v252, %v504
      %v509 = vmul.f32 %v490, %v497
      %v510 = vmul.f32 %v491, %v501
      %v511 = vmul.f32 %v492, %v505
      %512 = vst [vmem:[#allocation2] sm:$0xff] %v509
      %513 = vst [vmem:[#allocation2 + $0x8] sm:$0xff] %v510
      %514 = vst [vmem:[#allocation2 + $0x10] sm:$0xff] %v511
      %v515 = vld [vmem:[#allocation2] sm:$0xff]
      %v516 = vld [vmem:[#allocation2 + $0x8] sm:$0xff]
      %v517 = vld [vmem:[#allocation2 + $0x10] sm:$0xff]
      %v518 = vld [vmem:[%s4] sm:$0xff]
      %v519 = vld [vmem:[%s4 + $0x8] sm:$0xff]
      %v520 = vld [vmem:[%s5] sm:$0xff]
      %v521 = vld [vmem:[%s5 + $0x8] sm:$0xff]
      %522 = vrot.lane.b32.xlu0 %v515, 19
      %v523 = vpop.permute.xlu0 %522
      %524 = vrot.lane.b32.xlu0 %v516, 19
      %v525 = vpop.permute.xlu0 %524
      %526 = vrot.lane.b32.xlu0 %v517, 19
      %v527 = vpop.permute.xlu0 %526
      %v528 = vsel %vm266, %v525, %v527
      %v529 = vsel %vm266, %v523, %v525
      %v530 = vsel %vm266, %v527, %v523
      %531 = vrot.lane.b32.xlu0 %v515, 18
      %v532 = vpop.permute.xlu0 %531
      %533 = vrot.lane.b32.xlu0 %v516, 18
      %v534 = vpop.permute.xlu0 %533
      %535 = vrot.lane.b32.xlu0 %v517, 18
      %v536 = vpop.permute.xlu0 %535
      %v537 = vsel %vm276, %v534, %v536
      %v538 = vsel %vm276, %v532, %v534
      %v539 = vsel %vm276, %v536, %v532
      %540 = vrot.lane.b32.xlu0 %v515, 17
      %v541 = vpop.permute.xlu0 %540
      %542 = vrot.lane.b32.xlu0 %v516, 17
      %v543 = vpop.permute.xlu0 %542
      %544 = vrot.lane.b32.xlu0 %v517, 17
      %v545 = vpop.permute.xlu0 %544
      %v546 = vsel %vm286, %v543, %v545
      %v547 = vsel %vm286, %v541, %v543
      %v548 = vsel %vm286, %v545, %v541
      %549 = vrot.lane.b32.xlu0 %v515, 1
      %v550 = vpop.permute.xlu0 %549
      %551 = vrot.lane.b32.xlu0 %v516, 1
      %v552 = vpop.permute.xlu0 %551
      %553 = vrot.lane.b32.xlu0 %v517, 1
      %v554 = vpop.permute.xlu0 %553
      %v555 = vsel %vm296, %v552, %v554
      %v556 = vsel %vm296, %v550, %v552
      %v557 = vsel %vm296, %v554, %v550
      %558 = vrot.lane.b32.xlu0 %v515, 127
      %v559 = vpop.permute.xlu0 %558
      %560 = vrot.lane.b32.xlu0 %v516, 127
      %v561 = vpop.permute.xlu0 %560
      %562 = vrot.lane.b32.xlu0 %v517, 127
      %v563 = vpop.permute.xlu0 %562
      %v564 = vsel %vm306, %v561, %v563
      %v565 = vsel %vm306, %v559, %v561
      %v566 = vsel %vm306, %v563, %v559
      %567 = vrot.lane.b32.xlu0 %v515, 111
      %v568 = vpop.permute.xlu0 %567
      %569 = vrot.lane.b32.xlu0 %v516, 111
      %v570 = vpop.permute.xlu0 %569
      %571 = vrot.lane.b32.xlu0 %v517, 111
      %v572 = vpop.permute.xlu0 %571
      %v573 = vsel %vm316, %v570, %v572
      %v574 = vsel %vm316, %v568, %v570
      %v575 = vsel %vm316, %v572, %v568
      %576 = vrot.lane.b32.xlu0 %v515, 110
      %v577 = vpop.permute.xlu0 %576
      %578 = vrot.lane.b32.xlu0 %v516, 110
      %v579 = vpop.permute.xlu0 %578
      %580 = vrot.lane.b32.xlu0 %v517, 110
      %v581 = vpop.permute.xlu0 %580
      %v582 = vsel %vm326, %v579, %v581
      %v583 = vsel %vm326, %v577, %v579
      %v584 = vsel %vm326, %v581, %v577
      %585 = vrot.lane.b32.xlu0 %v515, 109
      %v586 = vpop.permute.xlu0 %585
      %587 = vrot.lane.b32.xlu0 %v516, 109
      %v588 = vpop.permute.xlu0 %587
      %589 = vrot.lane.b32.xlu0 %v517, 109
      %v590 = vpop.permute.xlu0 %589
      %v591 = vsel %vm336, %v588, %v590
      %v592 = vsel %vm336, %v586, %v588
      %v593 = vsel %vm336, %v590, %v586
      %595 = vset.pattern.permute.xlu0 0
      %596 = vperm.xlu0 %595, %v520
      %v597 = vpop.permute.xlu0 %596
      %600 = vset.pattern.permute.xlu0 0
      %601 = vperm.xlu0 %600, %v521
      %v602 = vpop.permute.xlu0 %601
      %v605 = vsel %vm345, %v518, 0
      %v608 = vsel %vm345, %v519, 0
      %610 = vmatprep.subr.mxu0 0.0
      %611 = vmatpush1.msra.mxu0 0.0
      %612 = vmatprep.subr.mxu0 0.0
      %613 = vmatpush1.msra.mxu0 0.0
      %614 = vmatprep.subr.mxu0 0.0
      %615 = vmatpush1.msra.mxu0 0.0
      %616 = vmatprep.subr.mxu0 0.0
      %617 = vmatpush1.msra.mxu0 0.0
      %618 = vmatprep.subr.mxu0 0.0
      %619 = vmatpush1.msra.mxu0 0.0
      %620 = vmatprep.subr.mxu0 0.0
      %621 = vmatpush1.msra.mxu0 0.0
      %622 = vmatprep.subr.mxu0 0.0
      %623 = vmatpush1.msra.mxu0 0.0
      %624 = vmatprep.subr.mxu0 %v591
      %625 = vmatpush1.msra.mxu0 %v592
      %626 = vmatprep.subr.mxu0 %v582
      %627 = vmatpush1.msra.mxu0 %v583
      %628 = vmatprep.subr.mxu0 %v573
      %629 = vmatpush1.msra.mxu0 %v574
      %630 = vmatprep.subr.mxu0 %v564
      %631 = vmatpush1.msra.mxu0 %v565
      %632 = vmatprep.subr.mxu0 %v516
      %633 = vmatpush1.msra.mxu0 %v515
      %634 = vmatprep.subr.mxu0 %v556
      %635 = vmatpush1.msra.mxu0 %v557
      %636 = vmatprep.subr.mxu0 %v547
      %637 = vmatpush1.msra.mxu0 %v548
      %638 = vmatprep.subr.mxu0 %v538
      %639 = vmatpush1.msra.mxu0 %v539
      %640 = vmatprep.subr.mxu0 %v529
      %641 = vmatpush1.msra.mxu0 %v530
      %642 = vmatprep.subr.mxu0 0.0
      %643 = vmatpush2.msra.mxu0 0.0
      %644 = vmatprep.subr.mxu0 0.0
      %645 = vmatpush2.msra.mxu0 0.0
      %646 = vmatprep.subr.mxu0 0.0
      %647 = vmatpush2.msra.mxu0 0.0
      %648 = vmatprep.subr.mxu0 0.0
      %649 = vmatpush2.msra.mxu0 0.0
      %650 = vmatprep.subr.mxu0 0.0
      %651 = vmatpush2.msra.mxu0 0.0
      %652 = vmatprep.subr.mxu0 0.0
      %653 = vmatpush2.msra.mxu0 0.0
      %654 = vmatprep.subr.mxu0 0.0
      %655 = vmatpush2.msra.mxu0 0.0
      %656 = vmatprep.subr.mxu0 0.0
      %657 = vmatpush2.msra.mxu0 0.0
      %658 = vmatprep.subr.mxu0 0.0
      %659 = vmatpush2.msra.mxu0 0.0
      %660 = vmatprep.subr.mxu0 0.0
      %661 = vmatpush2.msra.mxu0 0.0
      %662 = vmatprep.subr.mxu0 0.0
      %663 = vmatpush2.msra.mxu0 0.0
      %664 = vmatprep.subr.mxu0 0.0
      %665 = vmatpush2.msra.mxu0 0.0
      %666 = vmatprep.subr.mxu0 0.0
      %667 = vmatpush2.msra.mxu0 0.0
      %668 = vmatprep.subr.mxu0 0.0
      %669 = vmatpush2.msra.mxu0 0.0
      %670 = vmatprep.subr.mxu0 0.0
      %671 = vmatpush2.msra.mxu0 0.0
      %672 = vmatprep.subr.mxu0 0.0
      %673 = vmatpush2.msra.mxu0 0.0
      %674 = vmatprep.mubr.f32.mxu0 0.0
      %675 = vmatmul.mubr.f32.gmra.mxu0 %v605
      %v676 = vpop.f32.mrf.mxu0
      %v677 = vadd.f32 %v597, %v676
      %v678 = vpop.f32.mrf.mxu0
      %v679 = vadd.f32 %v597, %v678
      %680 = vmatprep.mubr.f32.mxu0 0.0
      %681 = vmatmul.mubr.f32.gmra.mxu0 %v608
      %v682 = vpop.f32.mrf.mxu0
      %v683 = vadd.f32 %v602, %v682
      %v684 = vpop.f32.mrf.mxu0
      %v685 = vadd.f32 %v602, %v684
      %686 = vdwg.mxu0
      %687 = vmatprep.subr.mxu0 0.0
      %688 = vmatpush1.msra.mxu0 0.0
      %689 = vmatprep.subr.mxu0 0.0
      %690 = vmatpush1.msra.mxu0 0.0
      %691 = vmatprep.subr.mxu0 0.0
      %692 = vmatpush1.msra.mxu0 0.0
      %693 = vmatprep.subr.mxu0 0.0
      %694 = vmatpush1.msra.mxu0 0.0
      %695 = vmatprep.subr.mxu0 0.0
      %696 = vmatpush1.msra.mxu0 0.0
      %697 = vmatprep.subr.mxu0 0.0
      %698 = vmatpush1.msra.mxu0 0.0
      %699 = vmatprep.subr.mxu0 0.0
      %700 = vmatpush1.msra.mxu0 0.0
      %701 = vmatprep.subr.mxu0 0.0
      %702 = vmatpush1.msra.mxu0 %v593
      %703 = vmatprep.subr.mxu0 0.0
      %704 = vmatpush1.msra.mxu0 %v584
      %705 = vmatprep.subr.mxu0 0.0
      %706 = vmatpush1.msra.mxu0 %v575
      %707 = vmatprep.subr.mxu0 0.0
      %708 = vmatpush1.msra.mxu0 %v566
      %709 = vmatprep.subr.mxu0 0.0
      %710 = vmatpush1.msra.mxu0 %v517
      %711 = vmatprep.subr.mxu0 0.0
      %712 = vmatpush1.msra.mxu0 %v555
      %713 = vmatprep.subr.mxu0 0.0
      %714 = vmatpush1.msra.mxu0 %v546
      %715 = vmatprep.subr.mxu0 0.0
      %716 = vmatpush1.msra.mxu0 %v537
      %717 = vmatprep.subr.mxu0 0.0
      %718 = vmatpush1.msra.mxu0 %v528
      %719 = vmatprep.subr.mxu0 0.0
      %720 = vmatpush2.msra.mxu0 0.0
      %721 = vmatprep.subr.mxu0 0.0
      %722 = vmatpush2.msra.mxu0 0.0
      %723 = vmatprep.subr.mxu0 0.0
      %724 = vmatpush2.msra.mxu0 0.0
      %725 = vmatprep.subr.mxu0 0.0
      %726 = vmatpush2.msra.mxu0 0.0
      %727 = vmatprep.subr.mxu0 0.0
      %728 = vmatpush2.msra.mxu0 0.0
      %729 = vmatprep.subr.mxu0 0.0
      %730 = vmatpush2.msra.mxu0 0.0
      %731 = vmatprep.subr.mxu0 0.0
      %732 = vmatpush2.msra.mxu0 0.0
      %733 = vmatprep.subr.mxu0 0.0
      %734 = vmatpush2.msra.mxu0 0.0
      %735 = vmatprep.subr.mxu0 0.0
      %736 = vmatpush2.msra.mxu0 0.0
      %737 = vmatprep.subr.mxu0 0.0
      %738 = vmatpush2.msra.mxu0 0.0
      %739 = vmatprep.subr.mxu0 0.0
      %740 = vmatpush2.msra.mxu0 0.0
      %741 = vmatprep.subr.mxu0 0.0
      %742 = vmatpush2.msra.mxu0 0.0
      %743 = vmatprep.subr.mxu0 0.0
      %744 = vmatpush2.msra.mxu0 0.0
      %745 = vmatprep.subr.mxu0 0.0
      %746 = vmatpush2.msra.mxu0 0.0
      %747 = vmatprep.subr.mxu0 0.0
      %748 = vmatpush2.msra.mxu0 0.0
      %749 = vmatprep.subr.mxu0 0.0
      %750 = vmatpush2.msra.mxu0 0.0
      %751 = vmatprep.mubr.f32.mxu0 0.0
      %752 = vmatmul.mubr.f32.gmra.mxu0 %v605
      %v753 = vpop.f32.mrf.mxu0
      %v754 = vadd.f32 %v597, %v753
      %v755 = vpop.f32.mrf.mxu0
      %756 = vmatprep.mubr.f32.mxu0 0.0
      %757 = vmatmul.mubr.f32.gmra.mxu0 %v608
      %v758 = vpop.f32.mrf.mxu0
      %v759 = vadd.f32 %v602, %v758
      %v760 = vpop.f32.mrf.mxu0
      %761 = vdwg.mxu0
      %v762 = vmax.f32 %v677, 0.0
      %v763 = vmax.f32 %v679, 0.0
      %v764 = vmax.f32 %v754, 0.0
      %v765 = vmax.f32 %v683, 0.0
      %v766 = vmax.f32 %v685, 0.0
      %v767 = vmax.f32 %v759, 0.0
      %v768 = vmul.f32 %v762, %v497
      %v769 = vmul.f32 %v763, %v501
      %v770 = vmul.f32 %v764, %v505
      %v771 = vmul.f32 %v765, %v497
      %v772 = vmul.f32 %v766, %v501
      %v773 = vmul.f32 %v767, %v505
      %774 = vst [vmem:[%s251] sm:$0xff] %v768
      %775 = vst [vmem:[%s251 + $0x8] sm:$0xff] %v769
      %776 = vst [vmem:[%s251 + $0x10] sm:$0xff] %v770
      %777 = vst [vmem:[%s251 + $0x18] sm:$0xff] %v771
      %778 = vst [vmem:[%s251 + $0x20] sm:$0xff] %v772
      %779 = vst [vmem:[%s251 + $0x28] sm:$0xff] %v773
      %p780 = scmp.lt.s32.totalorder %s17, 1
      %s781 = scalar_select %p780, %s17, 1
      %s782 = smul.addr %s781, 6
      %s783 = smul.addr %s782, 8
      %s784 = scalar_lea.vmem %s6, %s783
      // Predicated region
      $region45: #{cam_layers_forward.1} parent=43 // pred_check
        %p785 = pneg %p166
      $region46: #{cam_layers_forward.1} parent=43 // pred_check_branch
        %787 = sbr.rel (%p785) target = $region48
      $region47: #{cam_layers_forward.1} parent=43 // pred_region
        _
      $region48: #{cam_layers_forward.1} parent=43 // pred_fallthru
        _
    $region44: #{cam_layers_forward.1} parent=5 // pred_fallthru
      _
    %p788 = scmp.le.s32.totalorder 2, %s12
    // Predicated region
    $region49: #{cam_layers_forward.1} parent=5 // pred_check
      %p789 = pneg %p788
    $region50: #{cam_layers_forward.1} parent=5 // pred_check_branch
      %791 = sbr.rel (%p789) target = $region52
    $region51: #{cam_layers_forward.1} parent=5 // pred_region
      %s792 = ssub.s32 %s12, 2
      // Predicated region
      $region53: #{cam_layers_forward.1} parent=51 // pred_check
        %p793 = pneg %p172
      $region54: #{cam_layers_forward.1} parent=51 // pred_check_branch
        %795 = sbr.rel (%p793) target = $region56
      $region55: #{cam_layers_forward.1} parent=51 // pred_region
        %p796 = scmp.lt.s32.totalorder %s18, 1
        %s797 = scalar_select %p796, %s18, 1
        %s798 = smul.addr %s797, 6
        %s799 = smul.addr %s798, 8
        %s800 = scalar_lea.vmem %s6, %s799
      $region56: #{cam_layers_forward.1} parent=51 // pred_fallthru
        _
    $region52: #{cam_layers_forward.1} parent=5 // pred_fallthru
      _
  $region6: #{cam_layers_forward.1} parent=0 // loop_footer
    %s16 = sadd.s32 1, %s12
  $region7: #{cam_layers_forward.1} parent=0 // loop_footer_branch
    %11 = sbr.rel target = $region3
  $region8: #{cam_layers_forward.1} parent=0 // loop_exit
    _

</llo_original>
